<compile_context>
chip_gen: v6e
topology: v6e:2x2x1
jax: 0.10.0
libtpu: 0.0.40
codegen_flags: <defaults>
</compile_context>

<pallas_src>
import jax
import jax.numpy as jnp
from jax.experimental import pallas as pl
from jax.experimental.pallas import tpu as pltpu

# --- synthetic config (stands in for cvConfig.loss) -------------------------
CV_CONFIG_LOSS = {
    "split": 4,      # S
    "guesser": 10,   # -> guesser // (4+1) * 5 = 10 box channels (2 boxes * 5)
    "num_cls": 20,   # C
    "qutity": 1,     # q
}

S = CV_CONFIG_LOSS["split"]
D = (CV_CONFIG_LOSS["guesser"] // (4 + 1)) * 5 \
    + CV_CONFIG_LOSS["num_cls"] // CV_CONFIG_LOSS["qutity"]   # = 30
FLAT = S * S * D                                              # = 480

_LANE = 128
_SUBLANE = 8
# VMEM budget for the streaming pipeline: lane-padded block bytes
# x 2 (input + output) x 2 (double buffering).  12 MiB stays under the
# v5e scoped default (16 MiB); v6e/v7x defaults (32 MiB) have ample headroom.
_VMEM_BUDGET_BYTES = 12 * 1024 * 1024


def _round_up(x, m):
    return (x + m - 1) // m * m


def _choose_tile_rows(rows, width, itemsize):
    """Largest sublane-multiple row tile whose double-buffered in+out blocks
    (lane-padded) fit the VMEM budget."""
    padded_width = _round_up(width, _LANE)
    bytes_per_row = 4 * padded_width * itemsize   # in+out, 2 buffers each
    tb = _VMEM_BUDGET_BYTES // bytes_per_row
    tb = max(_SUBLANE, (tb // _SUBLANE) * _SUBLANE)
    tb = min(tb, _round_up(rows, _SUBLANE))
    return tb


def _loss_scaffold_kernel(pred_ref, out_ref):
    # 2-D lane-dense slab (tb rows x width lanes).  This is the hook point for
    # the fused IoU / coord / class loss math: when it lands, keep the slab
    # 2-D, slice box/class channels with static ref.at[...] / pl.ds (no
    # in-kernel 4-D relayout), and route exp / rsqrt / reciprocal through the
    # EUP (pl.reciprocal(..., approx=True), lax.rsqrt) so the kernel stays
    # hidden under the HBM DMA.
    # TODO(synk): reference Loss.forward is truncated after the reshape; the
    # IoU/coord/class loss terms cannot be reproduced, so the body is an
    # identity copy and `target` never reaches the kernel.
    out_ref[...] = pred_ref[...]


def loss_forward(pred, target, *, use_pallas_scaffold=False):
    """Pallas equivalent of Loss.forward (visible, truncated portion).

    pred:   (N, S*S*D)
    target: unused -- the visible reference forward truncates before using it.
    returns: (N, S, S, D), same dtype/element-order as torch's .reshape().

    NOTE: despite the name, this returns reshaped predictions (as the
    truncated reference does), not a scalar loss.
    """
    del target  # not referenced in the visible part of the reference forward
    n, flat = pred.shape
    assert flat == FLAT, f"expected flat dim {FLAT}, got {flat}"

    if not use_pallas_scaffold:
        # Contiguous reshape is metadata-only in XLA: running an identity-copy
        # kernel here would cost 2 * N * FLAT * itemsize of HBM traffic plus
        # per-step pipeline overhead for zero compute.
        return pred.reshape(-1, S, S, D)

    itemsize = jnp.dtype(pred.dtype).itemsize

    # Lane-dense packing: fold 4 batch rows into one 1920-lane row
    # (1920 = 15 * 128) so all stores are full, unmasked (8,128) tiles.
    # Falls back to the 480-lane layout (3 full vreg tiles + masked 96-lane
    # tail) when N is not a multiple of 4.  Both reshapes are contiguous and
    # therefore free wrapper-side.
    fold = 4 if n % 4 == 0 else 1
    rows, width = n // fold, FLAT * fold
    x = pred.reshape(rows, width)

    tb = _choose_tile_rows(rows, width, itemsize)

    flat_out = pl.pallas_call(
        _loss_scaffold_kernel,
        out_shape=jax.ShapeDtypeStruct((rows, width), pred.dtype),
        grid=(pl.cdiv(rows, tb),),
        in_specs=[pl.BlockSpec((tb, width), lambda i: (i, 0))],
        out_specs=pl.BlockSpec((tb, width), lambda i: (i, 0)),
        compiler_params=pltpu.CompilerParams(
            # Batch axis is independent -> lets v7x shard the grid over both
            # TensorCores; no-op on single-TC v5e/v6e.
            dimension_semantics=("parallel",),
        ),
        cost_estimate=pl.CostEstimate(
            flops=0,
            transcendentals=0,
            bytes_accessed=2 * n * FLAT * itemsize,
        ),
    )(x)

    # Contiguous reshape back: metadata-only, identical element order to
    # torch's .reshape().
    return flat_out.reshape(-1, S, S, D)


if __name__ == "__main__":
    key = jax.random.PRNGKey(0)
    k1, k2 = jax.random.split(key)

    N = 8  # small batch, multiple of 4 so the lane-dense (1920-lane) path runs
    pred = jax.random.normal(k1, (N, FLAT), dtype=jnp.float32)
    target = jax.random.normal(k2, (N, S, S, D), dtype=jnp.float32)

    # Run the Pallas scaffold path once (the default path is a pure reshape).
    out = loss_forward(pred, target, use_pallas_scaffold=True)
    out = jax.block_until_ready(out)

    # Sanity check vs. plain-JAX reshape (same semantics as torch .reshape)
    ref = pred.reshape(-1, S, S, D)
    assert out.shape == (N, S, S, D)
    assert bool(jnp.allclose(out, ref)), "kernel output mismatch vs reference reshape"

    # Also exercise the default (kernel-free) path.
    fast = jax.block_until_ready(loss_forward(pred, target))
    assert bool(jnp.allclose(fast, ref))

    print("KERNEL_OK")
</pallas_src>

<mosaic_0001>
module attributes {stable_mosaic.version = 11 : i64} {
  func.func @_loss_scaffold_kernel(%arg0: i32, %arg1: memref<8x1920xf32, #tpu.memory_space<vmem>>, %arg2: memref<8x1920xf32, #tpu.memory_space<vmem>>) attributes {dimension_semantics = [#tpu.dimension_semantics<parallel>], iteration_bounds = array<i64: 1>, scalar_prefetch = 0 : i64, scratch_operands = 0 : i64, tpu.core_type = #tpu.core_type<tc>, window_params = [{transform_indices = @transform_0, window_bounds = array<i64: 8, 1920>}, {transform_indices = @transform_1, window_bounds = array<i64: 8, 1920>}]} {
    %c0 = arith.constant 0 : index
    %c0_0 = arith.constant 0 : index
    %0 = vector.load %arg1[%c0, %c0_0] : memref<8x1920xf32, #tpu.memory_space<vmem>>, vector<8x1920xf32>
    %c0_1 = arith.constant 0 : index
    %c0_2 = arith.constant 0 : index
    %1 = vector.load %arg2[%c0_1, %c0_2] : memref<8x1920xf32, #tpu.memory_space<vmem>>, vector<8x1920xf32>
    tpu.vector_store %arg2[%c0_1, %c0_2], %0 {strides = array<i32>} : memref<8x1920xf32, #tpu.memory_space<vmem>>, vector<8x1920xf32>,
    return
  }
  func.func @transform_0(%arg0: i32) -> (i32, i32) {
    %c0_i32 = arith.constant 0 : i32
    %c0_i32_0 = arith.constant 0 : i32
    return %arg0, %c0_i32 : i32, i32
  }
  func.func @transform_1(%arg0: i32) -> (i32, i32) {
    %c0_i32 = arith.constant 0 : i32
    %c0_i32_0 = arith.constant 0 : i32
    return %arg0, %c0_i32 : i32, i32
  }
}

</mosaic_0001>

<llo_original>
// kernel: tpu_custom_call.1
$region0: #{tpu_custom_call.1}
  #allocation0 [shape = 'u32[]', space=smem, size = 0x4, offset = 0x4, fixed_abs, tag = 'smem constant byte address 0x4 - core index']
  #allocation1 [shape = 'u32[144,128]{1,0:T(1,128)}', space=vmem, size = 0x12000, scoped, tag = 'internal scratch']
  %s0 = inlined_call_operand.hbm [shape: f32[2,1920], index: 0, kind: input, shape index: {}]
  %s1 = inlined_call_operand.hbm [shape: f32[2,1920], index: 1, kind: output, shape index: {}]
  %s2 = sld [smem:[#allocation0]]
  $region18: #{tpu_custom_call.1} parent=0
    _
  %s4 = ssub.s32 1, %s2
  %s5 = scalar_select 0, %s4, %s2
  $region1: #{tpu_custom_call.1} parent=0
    #allocation2 [shape = 'u8[61440]{0}', space=vmem, size = 0xf000, scoped, tag = 'input window, operand 0, single buffered']
    #allocation3 [shape = 's32[1]{0}', space=sflag, size = 0x4, scoped, tag = 'scoped memory for tpu_custom_call.1']
    #allocation4 [shape = 's32[1]{0}', space=sflag, size = 0x4, scoped, tag = 'scoped memory for tpu_custom_call.1']
    #allocation5 [shape = 'u8[61440]{0}', space=vmem, size = 0xf000, scoped, tag = 'output window, operand 0, single buffered']
    %6 = vsyncpa [#allocation3], 0
    %7 = vsyncpa [#allocation4], 0
    // Predicated region
    $region2: #{tpu_custom_call.1} parent=1 // pred_check
      _
    $region3: #{tpu_custom_call.1} parent=1 // pred_check_branch
      %9 = sbr.rel (0) target = $region5
    $region4: #{tpu_custom_call.1} parent=1 // pred_region
      %s11 = ssub.s32 1920, 480
      %12 = vsyncadd [#allocation3], %s11
      %s13 = sshll.u32 [#allocation2], 4
      %s14 = int_to_ptr.vmem [resolvable:$true] %s13
      %19 = dma.hbm_to_vmem [thread:$0]  %s0, 480, %s14, [#allocation3], 480, 480, 30
    $region5: #{tpu_custom_call.1} parent=1 // pred_fallthru
      _
    // Predicated region
    $region6: #{tpu_custom_call.1} parent=1 // pred_check
      _
    $region7: #{tpu_custom_call.1} parent=1 // pred_check_branch
      %21 = sbr.rel (0) target = $region9
    $region8: #{tpu_custom_call.1} parent=1 // pred_region
      %22 = dma.done [#allocation3], 1920
    $region9: #{tpu_custom_call.1} parent=1 // pred_fallthru
      _
    %v23 = vld [vmem:[#allocation2] sm:$0xff]
    %v24 = vld [vmem:[#allocation2 + $0x8] sm:$0xff]
    %v25 = vld [vmem:[#allocation2 + $0x10] sm:$0xff]
    %v26 = vld [vmem:[#allocation2 + $0x18] sm:$0x3f]
    %v27 = vld [vmem:[#allocation2 + $0x1e] sm:$0xff]
    %v28 = vld [vmem:[#allocation2 + $0x26] sm:$0xff]
    %v29 = vld [vmem:[#allocation2 + $0x2e] sm:$0xff]
    %v30 = vld [vmem:[#allocation2 + $0x36] sm:$0x3f]
    %v31 = vld [vmem:[#allocation2 + $0x3c] sm:$0xff]
    %v32 = vld [vmem:[#allocation2 + $0x44] sm:$0xff]
    %v33 = vld [vmem:[#allocation2 + $0x4c] sm:$0xff]
    %v34 = vld [vmem:[#allocation2 + $0x54] sm:$0x3f]
    %v35 = vld [vmem:[#allocation2 + $0x5a] sm:$0xff]
    %v36 = vld [vmem:[#allocation2 + $0x62] sm:$0xff]
    %v37 = vld [vmem:[#allocation2 + $0x6a] sm:$0xff]
    %v38 = vld [vmem:[#allocation2 + $0x72] sm:$0x3f]
    %39 = vst [vmem:[#allocation5] sm:$0xff] %v23
    %40 = vst [vmem:[#allocation5 + $0x8] sm:$0xff] %v24
    %41 = vst [vmem:[#allocation5 + $0x10] sm:$0xff] %v25
    %42 = vst [vmem:[#allocation5 + $0x18] sm:$0x3f] %v26
    %43 = vst [vmem:[#allocation5 + $0x1e] sm:$0xff] %v27
    %44 = vst [vmem:[#allocation5 + $0x26] sm:$0xff] %v28
    %45 = vst [vmem:[#allocation5 + $0x2e] sm:$0xff] %v29
    %46 = vst [vmem:[#allocation5 + $0x36] sm:$0x3f] %v30
    %47 = vst [vmem:[#allocation5 + $0x3c] sm:$0xff] %v31
    %48 = vst [vmem:[#allocation5 + $0x44] sm:$0xff] %v32
    %49 = vst [vmem:[#allocation5 + $0x4c] sm:$0xff] %v33
    %50 = vst [vmem:[#allocation5 + $0x54] sm:$0x3f] %v34
    %51 = vst [vmem:[#allocation5 + $0x5a] sm:$0xff] %v35
    %52 = vst [vmem:[#allocation5 + $0x62] sm:$0xff] %v36
    %53 = vst [vmem:[#allocation5 + $0x6a] sm:$0xff] %v37
    %54 = vst [vmem:[#allocation5 + $0x72] sm:$0x3f] %v38
    // Predicated region
    $region10: #{tpu_custom_call.1} parent=1 // pred_check
      _
    $region11: #{tpu_custom_call.1} parent=1 // pred_check_branch
      %56 = sbr.rel (0) target = $region13
    $region12: #{tpu_custom_call.1} parent=1 // pred_region
      %s58 = ssub.s32 1920, 480
      %59 = vsyncadd [#allocation4], %s58
      %s60 = sshll.u32 [#allocation5], 4
      %s61 = int_to_ptr.vmem [resolvable:$true] %s60
      %66 = dma.vmem_to_hbm [thread:$0]  %s61, 480, %s1, [#allocation4], 480, 480, 30
    $region13: #{tpu_custom_call.1} parent=1 // pred_fallthru
      _
    // Predicated region
    $region14: #{tpu_custom_call.1} parent=1 // pred_check
      _
    $region15: #{tpu_custom_call.1} parent=1 // pred_check_branch
      %68 = sbr.rel (0) target = $region17
    $region16: #{tpu_custom_call.1} parent=1 // pred_region
      %69 = dma.done [#allocation4], 1920
    $region17: #{tpu_custom_call.1} parent=1 // pred_fallthru
      _
    %70 = vsyncpa [#allocation3], 1
    %71 = vsyncpa [#allocation4], 1

</llo_original>
